<compile_context>
chip_gen: v7x
topology: tpu7x:2x2x1
jax: 0.10.0
libtpu: 0.0.40
codegen_flags: <defaults>
</compile_context>

<pallas_src>
import functools

import jax
import jax.numpy as jnp
from jax.experimental import pallas as pl
from jax.experimental.pallas import tpu as pltpu


SUBLANE = 8     # TPU sublane width (second-to-last dim granularity)


def _round_up(x: int, m: int) -> int:
    return ((x + m - 1) // m) * m


def qnetwork_kernel(x_ref,
                    w1_ref, b1_ref,
                    w2_ref, b2_ref,
                    w3_ref, b3_ref,
                    w4_ref, b4_ref,
                    o_ref):
    """All four matmuls + bias + ReLU fused in VMEM for one batch tile."""
    x = x_ref[...]

    h = jnp.dot(x, w1_ref[...], preferred_element_type=jnp.float32) + b1_ref[...]
    h = jnp.maximum(h, 0.0)

    h = jnp.dot(h, w2_ref[...], preferred_element_type=jnp.float32) + b2_ref[...]
    h = jnp.maximum(h, 0.0)

    h = jnp.dot(h, w3_ref[...], preferred_element_type=jnp.float32) + b3_ref[...]
    h = jnp.maximum(h, 0.0)

    out = jnp.dot(h, w4_ref[...], preferred_element_type=jnp.float32) + b4_ref[...]
    o_ref[...] = out.astype(o_ref.dtype)


@functools.partial(jax.jit, static_argnames=("tb",))
def qnetwork_forward(state, params, *, tb=512):
    """Forward pass of the QNetwork.

    state:  (B, state_size) float32
    params: dict w1..w4 with shape (in, out), b1..b4 with shape (1, out).
    Returns (B, action_size) float32 Q-values.
    """
    B, state_size = state.shape
    fc1 = params["w1"].shape[1]
    fc2 = params["w2"].shape[1]
    fc3 = params["w3"].shape[1]
    action_size = params["w4"].shape[1]

    # ---- batch tiling ------------------------------------------------------
    # If the whole batch fits in one tile, use a full-dim block (always legal,
    # no padding / masking at all). Otherwise use sublane-aligned tiles; the
    # ragged last tile is handled by Pallas boundary masking (per-row math, so
    # OOB rows can't contaminate valid rows, and their stores are dropped).
    if B <= tb:
        tb_eff = B
    else:
        tb_eff = _round_up(tb, SUBLANE)
    num_tiles = pl.cdiv(B, tb_eff)

    w1, b1 = params["w1"], params["b1"]
    w2, b2 = params["w2"], params["b2"]
    w3, b3 = params["w3"], params["b3"]
    w4, b4 = params["w4"], params["b4"]

    def _const2d(i):          # weights/biases: same block every grid step
        return (0, 0)

    def _batch_tile(i):       # activations: stream one batch tile per step
        return (i, 0)

    in_specs = [
        pl.BlockSpec((tb_eff, state_size), _batch_tile),   # x
        pl.BlockSpec(w1.shape, _const2d),                  # w1
        pl.BlockSpec(b1.shape, _const2d),                  # b1
        pl.BlockSpec(w2.shape, _const2d),                  # w2
        pl.BlockSpec(b2.shape, _const2d),                  # b2
        pl.BlockSpec(w3.shape, _const2d),                  # w3
        pl.BlockSpec(b3.shape, _const2d),                  # b3
        pl.BlockSpec(w4.shape, _const2d),                  # w4
        pl.BlockSpec(b4.shape, _const2d),                  # b4
    ]
    # Lane count = action_size (full dim) -> only useful bytes leave the chip.
    out_specs = pl.BlockSpec((tb_eff, action_size), _batch_tile)

    # Advisory cost model: lets XLA schedule neighbors around this short call.
    flops = 2 * B * (state_size * fc1 + fc1 * fc2 + fc2 * fc3
                     + fc3 * action_size)
    param_elems = (state_size * fc1 + fc1 + fc1 * fc2 + fc2
                   + fc2 * fc3 + fc3 + fc3 * action_size + action_size)
    bytes_accessed = 4 * (B * state_size + B * action_size + param_elems)
    cost = pl.CostEstimate(flops=flops, transcendentals=0,
                           bytes_accessed=bytes_accessed)

    return pl.pallas_call(
        qnetwork_kernel,
        out_shape=jax.ShapeDtypeStruct((B, action_size), jnp.float32),
        grid=(num_tiles,),
        in_specs=in_specs,
        out_specs=out_specs,
        compiler_params=pltpu.CompilerParams(
            # Independent batch tiles -> shardable across TensorCores (v7x).
            dimension_semantics=("parallel",)),
        cost_estimate=cost,
    )(state, w1, b1, w2, b2, w3, b3, w4, b4)


def init_params(key, state_size, action_size,
                fc1_size=64, fc2_size=32, fc3_size=16):
    """nn.Linear-style init: U(-1/sqrt(fan_in), +1/sqrt(fan_in))."""
    sizes = [(state_size, fc1_size),
             (fc1_size, fc2_size),
             (fc2_size, fc3_size),
             (fc3_size, action_size)]
    params = {}
    for i, (fan_in, fan_out) in enumerate(sizes, start=1):
        key, kw, kb = jax.random.split(key, 3)
        bound = 1.0 / jnp.sqrt(jnp.float32(fan_in))
        params[f"w{i}"] = jax.random.uniform(
            kw, (fan_in, fan_out), jnp.float32, -bound, bound)
        params[f"b{i}"] = jax.random.uniform(
            kb, (1, fan_out), jnp.float32, -bound, bound)
    return params


def qnetwork_ref(state, params):
    """Pure-JAX reference for correctness check."""
    h = jnp.maximum(state @ params["w1"] + params["b1"], 0.0)
    h = jnp.maximum(h @ params["w2"] + params["b2"], 0.0)
    h = jnp.maximum(h @ params["w3"] + params["b3"], 0.0)
    return h @ params["w4"] + params["b4"]


if __name__ == "__main__":
    key = jax.random.PRNGKey(0)
    batch, state_size, action_size = 2, 8, 4

    k_params, k_state = jax.random.split(key)
    params = init_params(k_params, state_size, action_size)
    state = jax.random.normal(k_state, (batch, state_size), jnp.float32)

    # Small batch: single full-dim tile.
    out = jax.block_until_ready(qnetwork_forward(state, params))
    ref = qnetwork_ref(state, params)
    assert out.shape == (batch, action_size)
    assert jnp.allclose(out, ref, atol=1e-5, rtol=1e-5)

    # Multi-tile path with a ragged tail: 3000 rows, TB=512 -> 6 tiles
    # (even split across v7x's two TensorCores; last tile covers 440 rows).
    big_state = jax.random.normal(jax.random.PRNGKey(1), (3000, state_size),
                                  jnp.float32)
    out_big = jax.block_until_ready(qnetwork_forward(big_state, params))
    ref_big = qnetwork_ref(big_state, params)
    assert out_big.shape == (3000, action_size)
    assert jnp.allclose(out_big, ref_big, atol=1e-4, rtol=1e-4)

    # TODO(synk): for inference-only DQN, fuse the greedy argmax over actions
    # into the kernel epilogue (masking any OOB rows) so only a (B,) int32
    # leaves the kernel.
    print("KERNEL_OK")
</pallas_src>

<mosaic_0001>
module attributes {stable_mosaic.version = 11 : i64} {
  func.func @qnetwork_kernel(%arg0: i32, %arg1: memref<2x8xf32, #tpu.memory_space<vmem>>, %arg2: memref<8x64xf32, #tpu.memory_space<vmem>>, %arg3: memref<1x64xf32, #tpu.memory_space<vmem>>, %arg4: memref<64x32xf32, #tpu.memory_space<vmem>>, %arg5: memref<1x32xf32, #tpu.memory_space<vmem>>, %arg6: memref<32x16xf32, #tpu.memory_space<vmem>>, %arg7: memref<1x16xf32, #tpu.memory_space<vmem>>, %arg8: memref<16x4xf32, #tpu.memory_space<vmem>>, %arg9: memref<1x4xf32, #tpu.memory_space<vmem>>, %arg10: memref<2x4xf32, #tpu.memory_space<vmem>>) attributes {dimension_semantics = [#tpu.dimension_semantics<parallel>], iteration_bounds = array<i64: 1>, scalar_prefetch = 0 : i64, scratch_operands = 0 : i64, tpu.core_type = #tpu.core_type<tc>, window_params = [{transform_indices = @transform_0, window_bounds = array<i64: 2, 8>}, {pipeline_mode = #tpu.pipeline_mode<synchronous>, transform_indices = @transform_1, window_bounds = array<i64: 8, 64>}, {pipeline_mode = #tpu.pipeline_mode<synchronous>, transform_indices = @transform_2, window_bounds = array<i64: 1, 64>}, {pipeline_mode = #tpu.pipeline_mode<synchronous>, transform_indices = @transform_3, window_bounds = array<i64: 64, 32>}, {pipeline_mode = #tpu.pipeline_mode<synchronous>, transform_indices = @transform_4, window_bounds = array<i64: 1, 32>}, {pipeline_mode = #tpu.pipeline_mode<synchronous>, transform_indices = @transform_5, window_bounds = array<i64: 32, 16>}, {pipeline_mode = #tpu.pipeline_mode<synchronous>, transform_indices = @transform_6, window_bounds = array<i64: 1, 16>}, {pipeline_mode = #tpu.pipeline_mode<synchronous>, transform_indices = @transform_7, window_bounds = array<i64: 16, 4>}, {pipeline_mode = #tpu.pipeline_mode<synchronous>, transform_indices = @transform_8, window_bounds = array<i64: 1, 4>}, {transform_indices = @transform_9, window_bounds = array<i64: 2, 4>}]} {
    %c0 = arith.constant 0 : index
    %c0_0 = arith.constant 0 : index
    %0 = vector.load %arg1[%c0, %c0_0] : memref<2x8xf32, #tpu.memory_space<vmem>>, vector<2x8xf32>
    %c0_1 = arith.constant 0 : index
    %c0_2 = arith.constant 0 : index
    %1 = vector.load %arg2[%c0_1, %c0_2] : memref<8x64xf32, #tpu.memory_space<vmem>>, vector<8x64xf32>
    %cst = arith.constant dense<0.000000e+00> : vector<2x64xf32>
    %2 = tpu.matmul %0, %1, %cst {dimension_numbers = #tpu.dot_dimension_numbers<[1], [0], [0], [1], [0, 0, 1, 1], [], []>} : vector<2x8xf32>, vector<8x64xf32>, vector<2x64xf32> -> vector<2x64xf32>
    %c0_3 = arith.constant 0 : index
    %c0_4 = arith.constant 0 : index
    %3 = vector.load %arg3[%c0_3, %c0_4] : memref<1x64xf32, #tpu.memory_space<vmem>>, vector<1x64xf32>
    %4 = vector.broadcast %3 : vector<1x64xf32> to vector<2x64xf32>
    %5 = arith.addf %2, %4 : vector<2x64xf32>
    %cst_5 = arith.constant 0.000000e+00 : f32
    %6 = vector.broadcast %cst_5 : f32 to vector<2x64xf32>
    %7 = arith.maximumf %5, %6 : vector<2x64xf32>
    %c0_6 = arith.constant 0 : index
    %c0_7 = arith.constant 0 : index
    %8 = vector.load %arg4[%c0_6, %c0_7] : memref<64x32xf32, #tpu.memory_space<vmem>>, vector<64x32xf32>
    %cst_8 = arith.constant dense<0.000000e+00> : vector<2x32xf32>
    %9 = tpu.matmul %7, %8, %cst_8 {dimension_numbers = #tpu.dot_dimension_numbers<[1], [0], [0], [1], [0, 0, 1, 1], [], []>} : vector<2x64xf32>, vector<64x32xf32>, vector<2x32xf32> -> vector<2x32xf32>
    %c0_9 = arith.constant 0 : index
    %c0_10 = arith.constant 0 : index
    %10 = vector.load %arg5[%c0_9, %c0_10] : memref<1x32xf32, #tpu.memory_space<vmem>>, vector<1x32xf32>
    %11 = vector.broadcast %10 : vector<1x32xf32> to vector<2x32xf32>
    %12 = arith.addf %9, %11 : vector<2x32xf32>
    %cst_11 = arith.constant 0.000000e+00 : f32
    %13 = vector.broadcast %cst_11 : f32 to vector<2x32xf32>
    %14 = arith.maximumf %12, %13 : vector<2x32xf32>
    %c0_12 = arith.constant 0 : index
    %c0_13 = arith.constant 0 : index
    %15 = vector.load %arg6[%c0_12, %c0_13] : memref<32x16xf32, #tpu.memory_space<vmem>>, vector<32x16xf32>
    %cst_14 = arith.constant dense<0.000000e+00> : vector<2x16xf32>
    %16 = tpu.matmul %14, %15, %cst_14 {dimension_numbers = #tpu.dot_dimension_numbers<[1], [0], [0], [1], [0, 0, 1, 1], [], []>} : vector<2x32xf32>, vector<32x16xf32>, vector<2x16xf32> -> vector<2x16xf32>
    %c0_15 = arith.constant 0 : index
    %c0_16 = arith.constant 0 : index
    %17 = vector.load %arg7[%c0_15, %c0_16] : memref<1x16xf32, #tpu.memory_space<vmem>>, vector<1x16xf32>
    %18 = vector.broadcast %17 : vector<1x16xf32> to vector<2x16xf32>
    %19 = arith.addf %16, %18 : vector<2x16xf32>
    %cst_17 = arith.constant 0.000000e+00 : f32
    %20 = vector.broadcast %cst_17 : f32 to vector<2x16xf32>
    %21 = arith.maximumf %19, %20 : vector<2x16xf32>
    %c0_18 = arith.constant 0 : index
    %c0_19 = arith.constant 0 : index
    %22 = vector.load %arg8[%c0_18, %c0_19] : memref<16x4xf32, #tpu.memory_space<vmem>>, vector<16x4xf32>
    %cst_20 = arith.constant dense<0.000000e+00> : vector<2x4xf32>
    %23 = tpu.matmul %21, %22, %cst_20 {dimension_numbers = #tpu.dot_dimension_numbers<[1], [0], [0], [1], [0, 0, 1, 1], [], []>} : vector<2x16xf32>, vector<16x4xf32>, vector<2x4xf32> -> vector<2x4xf32>
    %c0_21 = arith.constant 0 : index
    %c0_22 = arith.constant 0 : index
    %24 = vector.load %arg9[%c0_21, %c0_22] : memref<1x4xf32, #tpu.memory_space<vmem>>, vector<1x4xf32>
    %25 = vector.broadcast %24 : vector<1x4xf32> to vector<2x4xf32>
    %26 = arith.addf %23, %25 : vector<2x4xf32>
    %c0_23 = arith.constant 0 : index
    %c0_24 = arith.constant 0 : index
    %27 = vector.load %arg10[%c0_23, %c0_24] : memref<2x4xf32, #tpu.memory_space<vmem>>, vector<2x4xf32>
    tpu.vector_store %arg10[%c0_23, %c0_24], %26 {strides = array<i32>} : memref<2x4xf32, #tpu.memory_space<vmem>>, vector<2x4xf32>,
    return
  }
  func.func @transform_0(%arg0: i32) -> (i32, i32) {
    %c0_i32 = arith.constant 0 : i32
    %c0_i32_0 = arith.constant 0 : i32
    return %arg0, %c0_i32 : i32, i32
  }
  func.func @transform_1(%arg0: i32) -> (i32, i32) {
    %c0_i32 = arith.constant 0 : i32
    %c0_i32_0 = arith.constant 0 : i32
    %c0_i32_1 = arith.constant 0 : i32
    return %c0_i32, %c0_i32_0 : i32, i32
  }
  func.func @transform_2(%arg0: i32) -> (i32, i32) {
    %c0_i32 = arith.constant 0 : i32
    %c0_i32_0 = arith.constant 0 : i32
    %c0_i32_1 = arith.constant 0 : i32
    return %c0_i32, %c0_i32_0 : i32, i32
  }
  func.func @transform_3(%arg0: i32) -> (i32, i32) {
    %c0_i32 = arith.constant 0 : i32
    %c0_i32_0 = arith.constant 0 : i32
    %c0_i32_1 = arith.constant 0 : i32
    return %c0_i32, %c0_i32_0 : i32, i32
  }
  func.func @transform_4(%arg0: i32) -> (i32, i32) {
    %c0_i32 = arith.constant 0 : i32
    %c0_i32_0 = arith.constant 0 : i32
    %c0_i32_1 = arith.constant 0 : i32
    return %c0_i32, %c0_i32_0 : i32, i32
  }
  func.func @transform_5(%arg0: i32) -> (i32, i32) {
    %c0_i32 = arith.constant 0 : i32
    %c0_i32_0 = arith.constant 0 : i32
    %c0_i32_1 = arith.constant 0 : i32
    return %c0_i32, %c0_i32_0 : i32, i32
  }
  func.func @transform_6(%arg0: i32) -> (i32, i32) {
    %c0_i32 = arith.constant 0 : i32
    %c0_i32_0 = arith.constant 0 : i32
    %c0_i32_1 = arith.constant 0 : i32
    return %c0_i32, %c0_i32_0 : i32, i32
  }
  func.func @transform_7(%arg0: i32) -> (i32, i32) {
    %c0_i32 = arith.constant 0 : i32
    %c0_i32_0 = arith.constant 0 : i32
    %c0_i32_1 = arith.constant 0 : i32
    return %c0_i32, %c0_i32_0 : i32, i32
  }
  func.func @transform_8(%arg0: i32) -> (i32, i32) {
    %c0_i32 = arith.constant 0 : i32
    %c0_i32_0 = arith.constant 0 : i32
    %c0_i32_1 = arith.constant 0 : i32
    return %c0_i32, %c0_i32_0 : i32, i32
  }
  func.func @transform_9(%arg0: i32) -> (i32, i32) {
    %c0_i32 = arith.constant 0 : i32
    %c0_i32_0 = arith.constant 0 : i32
    return %arg0, %c0_i32 : i32, i32
  }
}

</mosaic_0001>

<llo_original>
// kernel: qnetwork_forward.1
$region0: #{qnetwork_forward.1}
  #allocation0 [shape = 'u32[]', space=smem, size = 0x4, offset = 0x4, fixed_abs, tag = 'smem constant byte address 0x4 - core index']
  #allocation1 [shape = 'u32[144,128]{1,0:T(1,128)}', space=vmem, size = 0x12000, scoped, tag = 'internal scratch']
  %s0 = inlined_call_operand.vmem [shape: f32[2,8], index: 0, kind: input, shape index: {}]
  %s1 = inlined_call_operand.vmem [shape: f32[8,64], index: 1, kind: input, shape index: {}]
  %s2 = inlined_call_operand.vmem [shape: f32[1,64], index: 2, kind: input, shape index: {}]
  %s3 = inlined_call_operand.vmem [shape: f32[64,32], index: 3, kind: input, shape index: {}]
  %s4 = inlined_call_operand.vmem [shape: f32[1,32], index: 4, kind: input, shape index: {}]
  %s5 = inlined_call_operand.vmem [shape: f32[32,16], index: 5, kind: input, shape index: {}]
  %s6 = inlined_call_operand.vmem [shape: f32[1,16], index: 6, kind: input, shape index: {}]
  %s7 = inlined_call_operand.vmem [shape: f32[16,4], index: 7, kind: input, shape index: {}]
  %s8 = inlined_call_operand.vmem [shape: f32[1,4], index: 8, kind: input, shape index: {}]
  %s9 = inlined_call_operand.hbm [shape: f32[2,4], index: 9, kind: output, shape index: {}]
  %s10 = sld [smem:[#allocation0]]
  $region46: #{qnetwork_forward.1} parent=0
    _
  %s12 = ssub.s32 1, %s10
  %s13 = scalar_select 0, %s12, %s10
  $region1: #{qnetwork_forward.1} parent=0
    #allocation2 [shape = 'u8[1024]{0}', space=vmem, size = 0x400, scoped, tag = 'output window, operand 0, single buffered']
    #allocation3 [shape = 's32[1]{0}', space=sflag, size = 0x4, scoped, tag = 'scoped memory for qnetwork_forward.1']
    %14 = vsyncpa [#allocation3], 0
    // Predicated region
    $region2: #{qnetwork_forward.1} parent=1 // pred_check
      _
    $region3: #{qnetwork_forward.1} parent=1 // pred_check_branch
      %16 = sbr.rel (0) target = $region5
    $region4: #{qnetwork_forward.1} parent=1 // pred_region
      _
    $region5: #{qnetwork_forward.1} parent=1 // pred_fallthru
      _
    // Predicated region
    $region6: #{qnetwork_forward.1} parent=1 // pred_check
      _
    $region7: #{qnetwork_forward.1} parent=1 // pred_check_branch
      %18 = sbr.rel (0) target = $region9
    $region8: #{qnetwork_forward.1} parent=1 // pred_region
      _
    $region9: #{qnetwork_forward.1} parent=1 // pred_fallthru
      _
    // Predicated region
    $region10: #{qnetwork_forward.1} parent=1 // pred_check
      _
    $region11: #{qnetwork_forward.1} parent=1 // pred_check_branch
      %20 = sbr.rel (0) target = $region13
    $region12: #{qnetwork_forward.1} parent=1 // pred_region
      _
    $region13: #{qnetwork_forward.1} parent=1 // pred_fallthru
      _
    // Predicated region
    $region14: #{qnetwork_forward.1} parent=1 // pred_check
      _
    $region15: #{qnetwork_forward.1} parent=1 // pred_check_branch
      %22 = sbr.rel (0) target = $region17
    $region16: #{qnetwork_forward.1} parent=1 // pred_region
      _
    $region17: #{qnetwork_forward.1} parent=1 // pred_fallthru
      _
    // Predicated region
    $region18: #{qnetwork_forward.1} parent=1 // pred_check
      _
    $region19: #{qnetwork_forward.1} parent=1 // pred_check_branch
      %24 = sbr.rel (0) target = $region21
    $region20: #{qnetwork_forward.1} parent=1 // pred_region
      _
    $region21: #{qnetwork_forward.1} parent=1 // pred_fallthru
      _
    // Predicated region
    $region22: #{qnetwork_forward.1} parent=1 // pred_check
      _
    $region23: #{qnetwork_forward.1} parent=1 // pred_check_branch
      %26 = sbr.rel (0) target = $region25
    $region24: #{qnetwork_forward.1} parent=1 // pred_region
      _
    $region25: #{qnetwork_forward.1} parent=1 // pred_fallthru
      _
    // Predicated region
    $region26: #{qnetwork_forward.1} parent=1 // pred_check
      _
    $region27: #{qnetwork_forward.1} parent=1 // pred_check_branch
      %28 = sbr.rel (0) target = $region29
    $region28: #{qnetwork_forward.1} parent=1 // pred_region
      _
    $region29: #{qnetwork_forward.1} parent=1 // pred_fallthru
      _
    // Predicated region
    $region30: #{qnetwork_forward.1} parent=1 // pred_check
      _
    $region31: #{qnetwork_forward.1} parent=1 // pred_check_branch
      %30 = sbr.rel (0) target = $region33
    $region32: #{qnetwork_forward.1} parent=1 // pred_region
      _
    $region33: #{qnetwork_forward.1} parent=1 // pred_fallthru
      _
    // Predicated region
    $region34: #{qnetwork_forward.1} parent=1 // pred_check
      _
    $region35: #{qnetwork_forward.1} parent=1 // pred_check_branch
      %32 = sbr.rel (0) target = $region37
    $region36: #{qnetwork_forward.1} parent=1 // pred_region
      _
    $region37: #{qnetwork_forward.1} parent=1 // pred_fallthru
      _
    %v33 = vld [vmem:[%s0] sm:$0x3]
    %v34 = vld [vmem:[%s1] sm:$0xff]
    %v35 = vld [vmem:[%s2] sm:$0x1]
    %v37 = vlaneseq
    %v38 = vshrl.u32 %v37, 7
    %v39 = vsub.s32 0, %v38
    %v40 = vrot.slane %v35, %v39
    %vm42 = vcmask 64512
    %v44 = vsel %vm42, %v33, 0
    %46 = vmatprep.subr.mxu0 0.0
    %47 = vmatpush1.msra.mxu0 %v34
    %48 = vmatprep.subr.mxu0 0.0
    %49 = vmatpush1.msra.mxu0 0.0
    %50 = vmatprep.subr.mxu0 0.0
    %51 = vmatpush1.msra.mxu0 0.0
    %52 = vmatprep.subr.mxu0 0.0
    %53 = vmatpush1.msra.mxu0 0.0
    %54 = vmatprep.subr.mxu0 0.0
    %55 = vmatpush1.msra.mxu0 0.0
    %56 = vmatprep.subr.mxu0 0.0
    %57 = vmatpush1.msra.mxu0 0.0
    %58 = vmatprep.subr.mxu0 0.0
    %59 = vmatpush1.msra.mxu0 0.0
    %60 = vmatprep.subr.mxu0 0.0
    %61 = vmatpush1.msra.mxu0 0.0
    %62 = vmatprep.subr.mxu0 0.0
    %63 = vmatpush1.msra.mxu0 0.0
    %64 = vmatprep.subr.mxu0 0.0
    %65 = vmatpush1.msra.mxu0 0.0
    %66 = vmatprep.subr.mxu0 0.0
    %67 = vmatpush1.msra.mxu0 0.0
    %68 = vmatprep.subr.mxu0 0.0
    %69 = vmatpush1.msra.mxu0 0.0
    %70 = vmatprep.subr.mxu0 0.0
    %71 = vmatpush1.msra.mxu0 0.0
    %72 = vmatprep.subr.mxu0 0.0
    %73 = vmatpush1.msra.mxu0 0.0
    %74 = vmatprep.subr.mxu0 0.0
    %75 = vmatpush1.msra.mxu0 0.0
    %76 = vmatprep.subr.mxu0 0.0
    %77 = vmatpush1.msra.mxu0 0.0
    %78 = vmatprep.subr.mxu0 0.0
    %79 = vmatpush1.msra.mxu0 0.0
    %80 = vmatprep.subr.mxu0 0.0
    %81 = vmatpush1.msra.mxu0 0.0
    %82 = vmatprep.subr.mxu0 0.0
    %83 = vmatpush1.msra.mxu0 0.0
    %84 = vmatprep.subr.mxu0 0.0
    %85 = vmatpush1.msra.mxu0 0.0
    %86 = vmatprep.subr.mxu0 0.0
    %87 = vmatpush1.msra.mxu0 0.0
    %88 = vmatprep.subr.mxu0 0.0
    %89 = vmatpush1.msra.mxu0 0.0
    %90 = vmatprep.subr.mxu0 0.0
    %91 = vmatpush1.msra.mxu0 0.0
    %92 = vmatprep.subr.mxu0 0.0
    %93 = vmatpush1.msra.mxu0 0.0
    %94 = vmatprep.subr.mxu0 0.0
    %95 = vmatpush1.msra.mxu0 0.0
    %96 = vmatprep.subr.mxu0 0.0
    %97 = vmatpush1.msra.mxu0 0.0
    %98 = vmatprep.subr.mxu0 0.0
    %99 = vmatpush1.msra.mxu0 0.0
    %100 = vmatprep.subr.mxu0 0.0
    %101 = vmatpush1.msra.mxu0 0.0
    %102 = vmatprep.subr.mxu0 0.0
    %103 = vmatpush1.msra.mxu0 0.0
    %104 = vmatprep.subr.mxu0 0.0
    %105 = vmatpush1.msra.mxu0 0.0
    %106 = vmatprep.subr.mxu0 0.0
    %107 = vmatpush1.msra.mxu0 0.0
    %108 = vmatprep.subr.mxu0 0.0
    %109 = vmatpush1.msra.mxu0 0.0
    %110 = vmatprep.mubr.f32.mxu0 0.0
    %111 = vmatmul.mubr.f32.gmra.mrb[0].mxu0 %v44
    %v112 = vpop.f32.mrb[0].mxu0
    %v113 = vadd.f32 %v40, %v112
    %v114 = vpop.f32.mrb[0].mxu0
    %115 = vdwg.mxu0
    %v116 = vmax.f32 %v113, 0.0
    %v117 = vld [vmem:[%s3] sm:$0xff]
    %v118 = vld [vmem:[%s3 + $0x8] sm:$0xff]
    %v119 = vld [vmem:[%s3 + $0x10] sm:$0xff]
    %v120 = vld [vmem:[%s3 + $0x18] sm:$0xff]
    %v121 = vld [vmem:[%s3 + $0x20] sm:$0xff]
    %v122 = vld [vmem:[%s3 + $0x28] sm:$0xff]
    %v123 = vld [vmem:[%s3 + $0x30] sm:$0xff]
    %v124 = vld [vmem:[%s3 + $0x38] sm:$0xff]
    %v125 = vld [vmem:[%s4] sm:$0x1]
    %v127 = vlaneseq
    %v128 = vshrl.u32 %v127, 7
    %v129 = vsub.s32 0, %v128
    %v130 = vrot.slane %v125, %v129
    %vm132 = vcmask 523264
    %v134 = vsel %vm132, %v116, 0
    %136 = vmatprep.subr.mxu0 0.0
    %137 = vmatpush1.msra.mxu0 %v117
    %138 = vmatprep.subr.mxu0 0.0
    %139 = vmatpush1.msra.mxu0 %v118
    %140 = vmatprep.subr.mxu0 0.0
    %141 = vmatpush1.msra.mxu0 %v119
    %142 = vmatprep.subr.mxu0 0.0
    %143 = vmatpush1.msra.mxu0 %v120
    %144 = vmatprep.subr.mxu0 0.0
    %145 = vmatpush1.msra.mxu0 %v121
    %146 = vmatprep.subr.mxu0 0.0
    %147 = vmatpush1.msra.mxu0 %v122
    %148 = vmatprep.subr.mxu0 0.0
    %149 = vmatpush1.msra.mxu0 %v123
    %150 = vmatprep.subr.mxu0 0.0
    %151 = vmatpush1.msra.mxu0 %v124
    %152 = vmatprep.subr.mxu0 0.0
    %153 = vmatpush1.msra.mxu0 0.0
    %154 = vmatprep.subr.mxu0 0.0
    %155 = vmatpush1.msra.mxu0 0.0
    %156 = vmatprep.subr.mxu0 0.0
    %157 = vmatpush1.msra.mxu0 0.0
    %158 = vmatprep.subr.mxu0 0.0
    %159 = vmatpush1.msra.mxu0 0.0
    %160 = vmatprep.subr.mxu0 0.0
    %161 = vmatpush1.msra.mxu0 0.0
    %162 = vmatprep.subr.mxu0 0.0
    %163 = vmatpush1.msra.mxu0 0.0
    %164 = vmatprep.subr.mxu0 0.0
    %165 = vmatpush1.msra.mxu0 0.0
    %166 = vmatprep.subr.mxu0 0.0
    %167 = vmatpush1.msra.mxu0 0.0
    %168 = vmatprep.subr.mxu0 0.0
    %169 = vmatpush1.msra.mxu0 0.0
    %170 = vmatprep.subr.mxu0 0.0
    %171 = vmatpush1.msra.mxu0 0.0
    %172 = vmatprep.subr.mxu0 0.0
    %173 = vmatpush1.msra.mxu0 0.0
    %174 = vmatprep.subr.mxu0 0.0
    %175 = vmatpush1.msra.mxu0 0.0
    %176 = vmatprep.subr.mxu0 0.0
    %177 = vmatpush1.msra.mxu0 0.0
    %178 = vmatprep.subr.mxu0 0.0
    %179 = vmatpush1.msra.mxu0 0.0
    %180 = vmatprep.subr.mxu0 0.0
    %181 = vmatpush1.msra.mxu0 0.0
    %182 = vmatprep.subr.mxu0 0.0
    %183 = vmatpush1.msra.mxu0 0.0
    %184 = vmatprep.subr.mxu0 0.0
    %185 = vmatpush1.msra.mxu0 0.0
    %186 = vmatprep.subr.mxu0 0.0
    %187 = vmatpush1.msra.mxu0 0.0
    %188 = vmatprep.subr.mxu0 0.0
    %189 = vmatpush1.msra.mxu0 0.0
    %190 = vmatprep.subr.mxu0 0.0
    %191 = vmatpush1.msra.mxu0 0.0
    %192 = vmatprep.subr.mxu0 0.0
    %193 = vmatpush1.msra.mxu0 0.0
    %194 = vmatprep.subr.mxu0 0.0
    %195 = vmatpush1.msra.mxu0 0.0
    %196 = vmatprep.subr.mxu0 0.0
    %197 = vmatpush1.msra.mxu0 0.0
    %198 = vmatprep.subr.mxu0 0.0
    %199 = vmatpush1.msra.mxu0 0.0
    %200 = vmatprep.mubr.f32.mxu0 0.0
    %201 = vmatmul.mubr.f32.gmra.mrb[0].mxu0 %v134
    %v202 = vpop.f32.mrb[0].mxu0
    %v203 = vadd.f32 %v130, %v202
    %v204 = vpop.f32.mrb[0].mxu0
    %205 = vdwg.mxu0
    %v206 = vmax.f32 %v203, 0.0
    %v207 = vld [vmem:[%s5] sm:$0xff]
    %v208 = vld [vmem:[%s5 + $0x8] sm:$0xff]
    %v209 = vld [vmem:[%s5 + $0x10] sm:$0xff]
    %v210 = vld [vmem:[%s5 + $0x18] sm:$0xff]
    %v211 = vld [vmem:[%s6] sm:$0x1]
    %v213 = vlaneseq
    %v214 = vshrl.u32 %v213, 7
    %v215 = vsub.s32 0, %v214
    %v216 = vrot.slane %v211, %v215
    %vm218 = vcmask 261120
    %v220 = vsel %vm218, %v206, 0
    %222 = vmatprep.subr.mxu0 0.0
    %223 = vmatpush1.msra.mxu0 %v207
    %224 = vmatprep.subr.mxu0 0.0
    %225 = vmatpush1.msra.mxu0 %v208
    %226 = vmatprep.subr.mxu0 0.0
    %227 = vmatpush1.msra.mxu0 %v209
    %228 = vmatprep.subr.mxu0 0.0
    %229 = vmatpush1.msra.mxu0 %v210
    %230 = vmatprep.subr.mxu0 0.0
    %231 = vmatpush1.msra.mxu0 0.0
    %232 = vmatprep.subr.mxu0 0.0
    %233 = vmatpush1.msra.mxu0 0.0
    %234 = vmatprep.subr.mxu0 0.0
    %235 = vmatpush1.msra.mxu0 0.0
    %236 = vmatprep.subr.mxu0 0.0
    %237 = vmatpush1.msra.mxu0 0.0
    %238 = vmatprep.subr.mxu0 0.0
    %239 = vmatpush1.msra.mxu0 0.0
    %240 = vmatprep.subr.mxu0 0.0
    %241 = vmatpush1.msra.mxu0 0.0
    %242 = vmatprep.subr.mxu0 0.0
    %243 = vmatpush1.msra.mxu0 0.0
    %244 = vmatprep.subr.mxu0 0.0
    %245 = vmatpush1.msra.mxu0 0.0
    %246 = vmatprep.subr.mxu0 0.0
    %247 = vmatpush1.msra.mxu0 0.0
    %248 = vmatprep.subr.mxu0 0.0
    %249 = vmatpush1.msra.mxu0 0.0
    %250 = vmatprep.subr.mxu0 0.0
    %251 = vmatpush1.msra.mxu0 0.0
    %252 = vmatprep.subr.mxu0 0.0
    %253 = vmatpush1.msra.mxu0 0.0
    %254 = vmatprep.subr.mxu0 0.0
    %255 = vmatpush1.msra.mxu0 0.0
    %256 = vmatprep.subr.mxu0 0.0
    %257 = vmatpush1.msra.mxu0 0.0
    %258 = vmatprep.subr.mxu0 0.0
    %259 = vmatpush1.msra.mxu0 0.0
    %260 = vmatprep.subr.mxu0 0.0
    %261 = vmatpush1.msra.mxu0 0.0
    %262 = vmatprep.subr.mxu0 0.0
    %263 = vmatpush1.msra.mxu0 0.0
    %264 = vmatprep.subr.mxu0 0.0
    %265 = vmatpush1.msra.mxu0 0.0
    %266 = vmatprep.subr.mxu0 0.0
    %267 = vmatpush1.msra.mxu0 0.0
    %268 = vmatprep.subr.mxu0 0.0
    %269 = vmatpush1.msra.mxu0 0.0
    %270 = vmatprep.subr.mxu0 0.0
    %271 = vmatpush1.msra.mxu0 0.0
    %272 = vmatprep.subr.mxu0 0.0
    %273 = vmatpush1.msra.mxu0 0.0
    %274 = vmatprep.subr.mxu0 0.0
    %275 = vmatpush1.msra.mxu0 0.0
    %276 = vmatprep.subr.mxu0 0.0
    %277 = vmatpush1.msra.mxu0 0.0
    %278 = vmatprep.subr.mxu0 0.0
    %279 = vmatpush1.msra.mxu0 0.0
    %280 = vmatprep.subr.mxu0 0.0
    %281 = vmatpush1.msra.mxu0 0.0
    %282 = vmatprep.subr.mxu0 0.0
    %283 = vmatpush1.msra.mxu0 0.0
    %284 = vmatprep.subr.mxu0 0.0
    %285 = vmatpush1.msra.mxu0 0.0
    %286 = vmatprep.mubr.f32.mxu0 0.0
    %287 = vmatmul.mubr.f32.gmra.mrb[0].mxu0 %v220
    %v288 = vpop.f32.mrb[0].mxu0
    %v289 = vadd.f32 %v216, %v288
    %v290 = vpop.f32.mrb[0].mxu0
    %291 = vdwg.mxu0
    %v292 = vmax.f32 %v289, 0.0
    %v293 = vld [vmem:[%s7] sm:$0xff]
    %v294 = vld [vmem:[%s7 + $0x8] sm:$0xff]
    %v295 = vld [vmem:[%s8] sm:$0x1]
    %v297 = vlaneseq
    %v298 = vshrl.u32 %v297, 7
    %v299 = vsub.s32 0, %v298
    %v300 = vrot.slane %v295, %v299
    %vm302 = vcmask 130048
    %v304 = vsel %vm302, %v292, 0
    %306 = vmatprep.subr.mxu0 0.0
    %307 = vmatpush1.msra.mxu0 %v293
    %308 = vmatprep.subr.mxu0 0.0
    %309 = vmatpush1.msra.mxu0 %v294
    %310 = vmatprep.subr.mxu0 0.0
    %311 = vmatpush1.msra.mxu0 0.0
    %312 = vmatprep.subr.mxu0 0.0
    %313 = vmatpush1.msra.mxu0 0.0
    %314 = vmatprep.subr.mxu0 0.0
    %315 = vmatpush1.msra.mxu0 0.0
    %316 = vmatprep.subr.mxu0 0.0
    %317 = vmatpush1.msra.mxu0 0.0
    %318 = vmatprep.subr.mxu0 0.0
    %319 = vmatpush1.msra.mxu0 0.0
    %320 = vmatprep.subr.mxu0 0.0
    %321 = vmatpush1.msra.mxu0 0.0
    %322 = vmatprep.subr.mxu0 0.0
    %323 = vmatpush1.msra.mxu0 0.0
    %324 = vmatprep.subr.mxu0 0.0
    %325 = vmatpush1.msra.mxu0 0.0
    %326 = vmatprep.subr.mxu0 0.0
    %327 = vmatpush1.msra.mxu0 0.0
    %328 = vmatprep.subr.mxu0 0.0
    %329 = vmatpush1.msra.mxu0 0.0
    %330 = vmatprep.subr.mxu0 0.0
    %331 = vmatpush1.msra.mxu0 0.0
    %332 = vmatprep.subr.mxu0 0.0
    %333 = vmatpush1.msra.mxu0 0.0
    %334 = vmatprep.subr.mxu0 0.0
    %335 = vmatpush1.msra.mxu0 0.0
    %336 = vmatprep.subr.mxu0 0.0
    %337 = vmatpush1.msra.mxu0 0.0
    %338 = vmatprep.subr.mxu0 0.0
    %339 = vmatpush1.msra.mxu0 0.0
    %340 = vmatprep.subr.mxu0 0.0
    %341 = vmatpush1.msra.mxu0 0.0
    %342 = vmatprep.subr.mxu0 0.0
    %343 = vmatpush1.msra.mxu0 0.0
    %344 = vmatprep.subr.mxu0 0.0
    %345 = vmatpush1.msra.mxu0 0.0
    %346 = vmatprep.subr.mxu0 0.0
    %347 = vmatpush1.msra.mxu0 0.0
    %348 = vmatprep.subr.mxu0 0.0
    %349 = vmatpush1.msra.mxu0 0.0
    %350 = vmatprep.subr.mxu0 0.0
    %351 = vmatpush1.msra.mxu0 0.0
    %352 = vmatprep.subr.mxu0 0.0
    %353 = vmatpush1.msra.mxu0 0.0
    %354 = vmatprep.subr.mxu0 0.0
    %355 = vmatpush1.msra.mxu0 0.0
    %356 = vmatprep.subr.mxu0 0.0
    %357 = vmatpush1.msra.mxu0 0.0
    %358 = vmatprep.subr.mxu0 0.0
    %359 = vmatpush1.msra.mxu0 0.0
    %360 = vmatprep.subr.mxu0 0.0
    %361 = vmatpush1.msra.mxu0 0.0
    %362 = vmatprep.subr.mxu0 0.0
    %363 = vmatpush1.msra.mxu0 0.0
    %364 = vmatprep.subr.mxu0 0.0
    %365 = vmatpush1.msra.mxu0 0.0
    %366 = vmatprep.subr.mxu0 0.0
    %367 = vmatpush1.msra.mxu0 0.0
    %368 = vmatprep.subr.mxu0 0.0
    %369 = vmatpush1.msra.mxu0 0.0
    %370 = vmatprep.mubr.f32.mxu0 0.0
    %371 = vmatmul.mubr.f32.gmra.mrb[0].mxu0 %v304
    %v372 = vpop.f32.mrb[0].mxu0
    %v373 = vadd.f32 %v300, %v372
    %v374 = vpop.f32.mrb[0].mxu0
    %375 = vdwg.mxu0
    %vm376 = vcmask 25600
    %377 = vst.msk [vmem:[#allocation2] sm:$0x3] %vm376, %v373
    // Predicated region
    $region38: #{qnetwork_forward.1} parent=1 // pred_check
      _
    $region39: #{qnetwork_forward.1} parent=1 // pred_check_branch
      %379 = sbr.rel (0) target = $region41
    $region40: #{qnetwork_forward.1} parent=1 // pred_region
      %s381 = ssub.s32 32, 32
      %382 = vsyncadd [#allocation3], %s381
      %s384 = sshll.u32 [#allocation2], 4
      %s385 = int_to_ptr.vmem [resolvable:$true] %s384
      %387 = dma.vmem_to_hbm [thread:$0]  %s385, 32, %s9, [#allocation3]
    $region41: #{qnetwork_forward.1} parent=1 // pred_fallthru
      _
    // Predicated region
    $region42: #{qnetwork_forward.1} parent=1 // pred_check
      _
    $region43: #{qnetwork_forward.1} parent=1 // pred_check_branch
      %389 = sbr.rel (0) target = $region45
    $region44: #{qnetwork_forward.1} parent=1 // pred_region
      %390 = dma.done [#allocation3], 32
    $region45: #{qnetwork_forward.1} parent=1 // pred_fallthru
      _
    %391 = vsyncpa [#allocation3], 1

</llo_original>
